<compile_context>
chip_gen: v7x
topology: tpu7x:2x2x1
jax: 0.10.0
libtpu: 0.0.40
codegen_flags: <defaults>
</compile_context>

<pallas_src>
import functools

import jax
import jax.numpy as jnp
from jax.experimental import pallas as pl
from jax.experimental.pallas import tpu as pltpu


# ---------------------------------------------------------------------------
# Pallas kernel: stage the micro-batch into the worker-side input buffer.
# ---------------------------------------------------------------------------
def _copy_kernel(x_ref, staged_ref):
    # "in_worker.set_input(batch_no, args)": copy the tile into the staged
    # (worker-side) buffer.
    staged_ref[...] = x_ref[...]


def _sublane_tile(dtype) -> int:
    # Native sublane packing: 4-byte -> 8 rows, 2-byte -> 16, 1-byte -> 32.
    return max(8, 32 // jnp.dtype(dtype).itemsize)


_BLOCK_TARGET_BYTES = 2 * 1024 * 1024  # per block buffer; x4 live with 2-deep pipelining


@functools.lru_cache(maxsize=None)
def _build_stage_input(rows: int, cols: int, dtype_name: str, donate: bool):
    """Build (once per signature) a jit-cached staging copy for a (rows, cols) slab."""
    dtype = jnp.dtype(dtype_name)
    itemsize = dtype.itemsize
    sub = _sublane_tile(dtype)

    if rows * cols * itemsize <= _BLOCK_TARGET_BYTES:
        row_tile = rows                                  # single full-extent block
    else:
        max_rows = max(sub, _BLOCK_TARGET_BYTES // max(1, cols * itemsize))
        row_tile = max(sub, (max_rows // sub) * sub)     # multiple of sublane tile
        row_tile = min(row_tile, rows)

    grid = (pl.cdiv(rows, row_tile),)

    call = pl.pallas_call(
        _copy_kernel,
        grid=grid,
        # Row-tiled, lane-dense blocks: contiguous in HBM, full-width stores.
        in_specs=[pl.BlockSpec((row_tile, cols), lambda i: (i, 0))],
        out_specs=pl.BlockSpec((row_tile, cols), lambda i: (i, 0)),
        out_shape=jax.ShapeDtypeStruct((rows, cols), dtype),
        # When the caller donates the input, alias it to the staged output and
        # the copy collapses to (at most) a buffer reuse.
        input_output_aliases={0: 0} if donate else {},
        compiler_params=pltpu.CompilerParams(
            dimension_semantics=("parallel",),  # v7x: shard the copy over 2 TCs
        ),
    )
    return jax.jit(call)


# ---------------------------------------------------------------------------
# Python-side stand-ins for the RPC plumbing (no compute)
# ---------------------------------------------------------------------------
class PipeTensor:
    def __init__(self, batch_no, output_token=None, backward_token=None):
        self.batch_no = batch_no
        self.output_token = output_token
        self.backward_token = backward_token


class PipeManagerLite:
    """Minimal manager: only the batch counter used by forward()."""

    def __init__(self, batch_cnt: int = 4):
        self.batch_cnt = batch_cnt
        self._batch_no = 0

    def get_batch_no(self) -> int:
        b = self._batch_no
        self._batch_no = (self._batch_no + 1) % self.batch_cnt
        return b


# ---------------------------------------------------------------------------
# PipeGraphRunner equivalent
# ---------------------------------------------------------------------------
class PipeGraphRunner:
    """forward(*args): stage input on the in-worker, return [PipeTensor(batch_no)]."""

    # TODO(synk): RPC worker assignment, scheduler step distribution,
    # fx.GraphModule partitioning and loss_fn registration are host-side
    # control flow with no Pallas equivalent; omitted.

    def __init__(self, manager: PipeManagerLite, donate_input: bool = False):
        self.manager = manager
        self.donate_input = donate_input
        self.in_worker_buffer = None  # staged micro-batch lives here

    def forward(self, x_nchw: jax.Array):
        # Host-side Python int; no device round trip, keeps forward async.
        batch_no = self.manager.get_batch_no()

        n, c, h, w = x_nchw.shape
        x_2d = x_nchw.reshape(n * c, h * w)  # lane axis = H*W (lane-dense)
        stage = _build_stage_input(n * c, h * w, str(x_2d.dtype), self.donate_input)
        staged = stage(x_2d)
        self.in_worker_buffer = staged.reshape(n, c, h, w)
        return [PipeTensor(batch_no)]

    __call__ = forward


# ---------------------------------------------------------------------------
if __name__ == "__main__":
    key = jax.random.PRNGKey(0)
    # NCHW input, small shapes: batch=2, channels=4, spatial=16x16
    x = jax.random.normal(key, (2, 4, 16, 16), dtype=jnp.float32)

    manager = PipeManagerLite(batch_cnt=4)
    runner = PipeGraphRunner(manager)

    out = runner(x)
    jax.block_until_ready(runner.in_worker_buffer)

    # Semantics check: staged buffer == input, batch_no sequence starts at 0.
    assert out[0].batch_no == 0
    assert bool(jnp.allclose(runner.in_worker_buffer, x))

    # Second call increments the batch number (manager.get_batch_no()).
    out2 = runner(x)
    jax.block_until_ready(runner.in_worker_buffer)
    assert out2[0].batch_no == 1

    print("KERNEL_OK")
</pallas_src>

<mosaic_0001>
module attributes {stable_mosaic.version = 11 : i64} {
  func.func @_copy_kernel(%arg0: i32, %arg1: memref<8x256xf32, #tpu.memory_space<vmem>>, %arg2: memref<8x256xf32, #tpu.memory_space<vmem>>) attributes {dimension_semantics = [#tpu.dimension_semantics<parallel>], iteration_bounds = array<i64: 1>, scalar_prefetch = 0 : i64, scratch_operands = 0 : i64, tpu.core_type = #tpu.core_type<tc>, window_params = [{transform_indices = @transform_0, window_bounds = array<i64: 8, 256>}, {transform_indices = @transform_1, window_bounds = array<i64: 8, 256>}]} {
    %c0 = arith.constant 0 : index
    %c0_0 = arith.constant 0 : index
    %0 = vector.load %arg1[%c0, %c0_0] : memref<8x256xf32, #tpu.memory_space<vmem>>, vector<8x256xf32>
    %c0_1 = arith.constant 0 : index
    %c0_2 = arith.constant 0 : index
    %1 = vector.load %arg2[%c0_1, %c0_2] : memref<8x256xf32, #tpu.memory_space<vmem>>, vector<8x256xf32>
    tpu.vector_store %arg2[%c0_1, %c0_2], %0 {strides = array<i32>} : memref<8x256xf32, #tpu.memory_space<vmem>>, vector<8x256xf32>,
    return
  }
  func.func @transform_0(%arg0: i32) -> (i32, i32) {
    %c0_i32 = arith.constant 0 : i32
    %c0_i32_0 = arith.constant 0 : i32
    return %arg0, %c0_i32 : i32, i32
  }
  func.func @transform_1(%arg0: i32) -> (i32, i32) {
    %c0_i32 = arith.constant 0 : i32
    %c0_i32_0 = arith.constant 0 : i32
    return %arg0, %c0_i32 : i32, i32
  }
}

</mosaic_0001>

<llo_original>
// kernel: tpu_custom_call.1
$region0: #{tpu_custom_call.1}
  #allocation0 [shape = 'u32[]', space=smem, size = 0x4, offset = 0x4, fixed_abs, tag = 'smem constant byte address 0x4 - core index']
  #allocation1 [shape = 'u32[144,128]{1,0:T(1,128)}', space=vmem, size = 0x12000, scoped, tag = 'internal scratch']
  %s0 = inlined_call_operand.hbm [shape: f32[8,256], index: 0, kind: input, shape index: {}]
  %s1 = inlined_call_operand.hbm [shape: f32[8,256], index: 1, kind: output, shape index: {}]
  %s2 = sld [smem:[#allocation0]]
  $region18: #{tpu_custom_call.1} parent=0
    _
  %s4 = ssub.s32 1, %s2
  %s5 = scalar_select 0, %s4, %s2
  $region1: #{tpu_custom_call.1} parent=0
    #allocation2 [shape = 'u8[8192]{0}', space=vmem, size = 0x2000, scoped, tag = 'input window, operand 0, single buffered']
    #allocation3 [shape = 's32[1]{0}', space=sflag, size = 0x4, scoped, tag = 'scoped memory for tpu_custom_call.1']
    #allocation4 [shape = 's32[1]{0}', space=sflag, size = 0x4, scoped, tag = 'scoped memory for tpu_custom_call.1']
    #allocation5 [shape = 'u8[8192]{0}', space=vmem, size = 0x2000, scoped, tag = 'output window, operand 0, single buffered']
    %6 = vsyncpa [#allocation3], 0
    %7 = vsyncpa [#allocation4], 0
    // Predicated region
    $region2: #{tpu_custom_call.1} parent=1 // pred_check
      _
    $region3: #{tpu_custom_call.1} parent=1 // pred_check_branch
      %9 = sbr.rel (0) target = $region5
    $region4: #{tpu_custom_call.1} parent=1 // pred_region
      %s11 = ssub.s32 256, 256
      %12 = vsyncadd [#allocation3], %s11
      %s14 = sshll.u32 [#allocation2], 4
      %s15 = int_to_ptr.vmem [resolvable:$true] %s14
      %17 = dma.hbm_to_vmem [thread:$0]  %s0, 256, %s15, [#allocation3]
    $region5: #{tpu_custom_call.1} parent=1 // pred_fallthru
      _
    // Predicated region
    $region6: #{tpu_custom_call.1} parent=1 // pred_check
      _
    $region7: #{tpu_custom_call.1} parent=1 // pred_check_branch
      %19 = sbr.rel (0) target = $region9
    $region8: #{tpu_custom_call.1} parent=1 // pred_region
      %20 = dma.done [#allocation3], 256
    $region9: #{tpu_custom_call.1} parent=1 // pred_fallthru
      _
    %v21 = vld [vmem:[#allocation2] sm:$0xff]
    %v22 = vld [vmem:[#allocation2 + $0x8] sm:$0xff]
    %23 = vst [vmem:[#allocation5] sm:$0xff] %v21
    %24 = vst [vmem:[#allocation5 + $0x8] sm:$0xff] %v22
    // Predicated region
    $region10: #{tpu_custom_call.1} parent=1 // pred_check
      _
    $region11: #{tpu_custom_call.1} parent=1 // pred_check_branch
      %26 = sbr.rel (0) target = $region13
    $region12: #{tpu_custom_call.1} parent=1 // pred_region
      %s28 = ssub.s32 256, 256
      %29 = vsyncadd [#allocation4], %s28
      %s31 = sshll.u32 [#allocation5], 4
      %s32 = int_to_ptr.vmem [resolvable:$true] %s31
      %34 = dma.vmem_to_hbm [thread:$0]  %s32, 256, %s1, [#allocation4]
    $region13: #{tpu_custom_call.1} parent=1 // pred_fallthru
      _
    // Predicated region
    $region14: #{tpu_custom_call.1} parent=1 // pred_check
      _
    $region15: #{tpu_custom_call.1} parent=1 // pred_check_branch
      %36 = sbr.rel (0) target = $region17
    $region16: #{tpu_custom_call.1} parent=1 // pred_region
      %37 = dma.done [#allocation4], 256
    $region17: #{tpu_custom_call.1} parent=1 // pred_fallthru
      _
    %38 = vsyncpa [#allocation3], 1
    %39 = vsyncpa [#allocation4], 1

</llo_original>
